<compile_context>
chip_gen: v7x
topology: tpu7x:2x2x1
jax: 0.10.0
libtpu: 0.0.40
codegen_flags: <defaults>
</compile_context>

<pallas_src>
import functools
import math

import jax
import jax.numpy as jnp
from jax import lax
from jax.experimental import pallas as pl
from jax.experimental.pallas import tpu as pltpu


def _round_up(x: int, m: int) -> int:
    return ((x + m - 1) // m) * m


def _hardneg_kernel(rows_ref, cols_ref, plog_ref, loss_ref, acc_a, acc_b, *,
                    temperature: float, tau_plus: float, beta: float, estimator: str,
                    batch_size: int, n_valid: int, row_tile: int, col_tile: int,
                    mask_cols: bool, use_bf16_matmul: bool):
    """One (row_tile, col_tile) step of the HardNegative loss.

    rows_ref:  (T, D)  row block of out = concat([out_1, out_2])
    cols_ref:  (T, D)  column block of out
    plog_ref:  (T, 1)  positive logits  sum(out_1*out_2, -1)/temperature  (duplicated per half)
    loss_ref:  (T, 1)  per-row loss (written on the last column step)
    acc_a/b:   (T, 1)  f32 online accumulators across column tiles
    """
    i = pl.program_id(0)
    j = pl.program_id(1)
    inv_t = 1.0 / temperature

    @pl.when(j == 0)
    def _init():
        acc_a[...] = jnp.zeros_like(acc_a)
        acc_b[...] = jnp.zeros_like(acc_b)

    rows = rows_ref[...].astype(jnp.float32)
    cols = cols_ref[...].astype(jnp.float32)
    if use_bf16_matmul:
        lhs, rhs = rows.astype(jnp.bfloat16), cols.astype(jnp.bfloat16)
    else:
        lhs, rhs = rows, cols

    # (T, T) similarity tile on the MXU; contract on D directly (no transpose copy).
    sim = lax.dot_general(lhs, rhs,
                          dimension_numbers=(((1,), (1,)), ((), ())),
                          preferred_element_type=jnp.float32) * inv_t

    # Per-tile exclusion mask: drop the diagonal, the positive-pair column and any padded
    # columns.  Built from small (T, T) iotas only.
    row_g = i * row_tile + lax.broadcasted_iota(jnp.int32, (row_tile, col_tile), 0)
    col_g = j * col_tile + lax.broadcasted_iota(jnp.int32, (row_tile, col_tile), 1)
    partner = jnp.where(row_g < batch_size, row_g + batch_size, row_g - batch_size)
    keep = (col_g != row_g) & (col_g != partner)
    if mask_cols:
        keep = keep & (col_g < n_valid)

    if estimator == "easy":
        acc_a[...] += jnp.sum(jnp.where(keep, jnp.exp(sim), 0.0),
                              axis=-1, keepdims=True)
    else:  # "hard"
        acc_a[...] += jnp.sum(jnp.where(keep, jnp.exp(beta * sim), 0.0),
                              axis=-1, keepdims=True)
        acc_b[...] += jnp.sum(jnp.where(keep, jnp.exp((1.0 + beta) * sim), 0.0),
                              axis=-1, keepdims=True)

    @pl.when(j == pl.num_programs(1) - 1)
    def _finalize():
        pos = jnp.exp(plog_ref[...].astype(jnp.float32))      # (T, 1)
        n_neg = float(n_valid - 2)                             # 2B - 2
        if estimator == "easy":
            ng = acc_a[...]
        else:
            reweight = n_neg * acc_b[...] / acc_a[...]
            ng = (-tau_plus * n_neg * pos + reweight) / (1.0 - tau_plus)
            ng = jnp.maximum(ng, n_neg * math.exp(-1.0 / temperature))
        loss_ref[...] = -jnp.log(pos / (pos + ng))


def hard_negative_loss(out_1, out_2, *, temperature, tau_plus, beta, estimator,
                       attr_uni=None, tile: int = 128, use_bf16_matmul: bool = False):
    """Forward pass of HardNegative (SimCLR debiased/hard-negative contrastive loss)."""
    if estimator not in ("hard", "easy"):
        raise Exception("Invalid estimator selected. Please use any of [hard, easy]")

    if attr_uni is not None:
        out_1 = out_1[attr_uni, :]
        out_2 = out_2[attr_uni, :]
    out_1 = out_1.astype(jnp.float32)
    out_2 = out_2.astype(jnp.float32)
    B, D = out_1.shape
    N = 2 * B

    # O(N*D) glue kept in plain JAX (tiny vs. the O(N^2*D) matmul inside the kernel).
    out = jnp.concatenate([out_1, out_2], axis=0)                     # (N, D)
    p_half = jnp.sum(out_1 * out_2, axis=-1) / float(temperature)     # (B,)
    pos_logit = jnp.concatenate([p_half, p_half], axis=0)[:, None]    # (N, 1)

    # Tile selection: 128 target (lane/MXU aligned), always a multiple of 8, pad N if needed.
    T = min(int(tile), _round_up(N, 8))
    padded_N = _round_up(N, T)
    if padded_N != N:
        out = jnp.pad(out, ((0, padded_N - N), (0, 0)))
        pos_logit = jnp.pad(pos_logit, ((0, padded_N - N), (0, 0)))
    n_tiles = padded_N // T

    kernel = functools.partial(
        _hardneg_kernel,
        temperature=float(temperature), tau_plus=float(tau_plus), beta=float(beta),
        estimator=estimator, batch_size=B, n_valid=N, row_tile=T, col_tile=T,
        mask_cols=(padded_N != N), use_bf16_matmul=use_bf16_matmul,
    )

    # Explicit scoped-VMEM budget: double-buffered row/col/pos blocks + sim tile + scratch,
    # with headroom; clamped to a range that is safe on v5e/v6e/v7x.
    est = 4 * (2 * 2 * (2 * T * D + T) + 4 * T * T + 4 * T) + (1 << 20)
    vmem_bytes = int(min(max(est, 16 << 20), 64 << 20))

    row_losses = pl.pallas_call(
        kernel,
        out_shape=jax.ShapeDtypeStruct((padded_N, 1), jnp.float32),
        grid_spec=pltpu.PrefetchScalarGridSpec(
            num_scalar_prefetch=0,
            grid=(n_tiles, n_tiles),                         # (rows, cols); cols = reduction
            in_specs=[
                pl.BlockSpec((T, D), lambda i, j: (i, 0)),   # row block of out
                pl.BlockSpec((T, D), lambda i, j: (j, 0)),   # column block of out
                pl.BlockSpec((T, 1), lambda i, j: (i, 0)),   # positive logits for the rows
            ],
            out_specs=pl.BlockSpec((T, 1), lambda i, j: (i, 0)),
            scratch_shapes=[pltpu.VMEM((T, 1), jnp.float32),
                            pltpu.VMEM((T, 1), jnp.float32)],
        ),
        compiler_params=pltpu.CompilerParams(
            dimension_semantics=("parallel", "arbitrary"),
            vmem_limit_bytes=vmem_bytes,
        ),
    )(out, out, pos_logit)

    return jnp.sum(row_losses[:N, 0]) / N


def vikl_hardneg_forward(img_z1, img_z2, text_z, attr_z, attr_uni, *,
                         tau_plus, beta, tit, tia, tta, tii, etit, etia, etta, etii):
    """Forward pass of Vikl_HardNeg. Returns (loss, met_dict)."""
    loss_i_t = hard_negative_loss(img_z1, text_z, temperature=tit, tau_plus=tau_plus,
                                  beta=beta, estimator=etit)
    loss_i_a = hard_negative_loss(img_z1, attr_z, temperature=tia, tau_plus=tau_plus,
                                  beta=beta, estimator=etia, attr_uni=attr_uni)
    loss_t_a = hard_negative_loss(text_z, attr_z, temperature=tta, tau_plus=tau_plus,
                                  beta=beta, estimator=etta, attr_uni=attr_uni)
    loss_inter_modal = (loss_i_a + loss_i_t + loss_t_a) / 3.0
    loss_intra_modal = hard_negative_loss(img_z1, img_z2, temperature=tii, tau_plus=tau_plus,
                                          beta=beta, estimator=etii)
    loss = loss_inter_modal + loss_intra_modal
    met_dict = {
        "loss_i_t": float(loss_i_t),
        "loss_i_a": float(loss_i_a),
        "loss_t_a": float(loss_t_a),
        "loss_intra_modal": float(loss_intra_modal),
        "loss_sum": float(loss),
    }
    return loss, met_dict


# ---------------------------------------------------------------------------
# Pure-JAX reference (mirrors the PyTorch module) for the sanity check below.
# ---------------------------------------------------------------------------
def _ref_hard_negative(out_1, out_2, temperature, tau_plus, beta, estimator, attr_uni=None):
    if attr_uni is not None:
        out_1 = out_1[attr_uni, :]
        out_2 = out_2[attr_uni, :]
    B = out_1.shape[0]
    N2 = 2 * B
    out = jnp.concatenate([out_1, out_2], axis=0)
    sim = (out @ out.T) / temperature
    neg = jnp.exp(sim)
    idx = jnp.arange(N2)
    part = jnp.where(idx < B, idx + B, idx - B)
    mask = jnp.ones((N2, N2), dtype=bool)
    mask = mask.at[idx, idx].set(False)
    mask = mask.at[idx, part].set(False)
    pos = jnp.exp(jnp.sum(out_1 * out_2, axis=-1) / temperature)
    pos = jnp.concatenate([pos, pos])
    n_neg = N2 - 2
    if estimator == "hard":
        imp = jnp.where(mask, jnp.exp(beta * sim), 0.0)
        reweight = jnp.sum(imp * jnp.where(mask, neg, 0.0), -1) / (jnp.sum(imp, -1) / n_neg)
        ng = (-tau_plus * n_neg * pos + reweight) / (1.0 - tau_plus)
        ng = jnp.maximum(ng, n_neg * math.exp(-1.0 / temperature))
    else:
        ng = jnp.sum(jnp.where(mask, neg, 0.0), -1)
    return jnp.mean(-jnp.log(pos / (pos + ng)))


if __name__ == "__main__":
    key = jax.random.PRNGKey(0)
    k1, k2, k3, k4 = jax.random.split(key, 4)
    B, D = 8, 32

    def _unit(k):
        x = jax.random.normal(k, (B, D), dtype=jnp.float32)
        return x / jnp.linalg.norm(x, axis=-1, keepdims=True)

    img_z1 = _unit(k1)
    img_z2 = _unit(k2)
    text_z = _unit(k3)
    attr_z = _unit(k4)
    # 6 selected rows -> N=12 (exercises the padded/masked-column path).
    attr_uni = jnp.array([0, 1, 2, 4, 5, 7], dtype=jnp.int32)

    params = dict(tau_plus=0.1, beta=1.0,
                  tit=0.5, tia=0.6, tta=0.7, tii=0.4,
                  etit="hard", etia="easy", etta="hard", etii="easy")

    loss, met = vikl_hardneg_forward(img_z1, img_z2, text_z, attr_z, attr_uni, **params)
    loss = jax.block_until_ready(loss)

    # Sanity check against the pure-JAX reference of the PyTorch module.
    r_it = _ref_hard_negative(img_z1, text_z, params["tit"], params["tau_plus"],
                              params["beta"], params["etit"])
    r_ia = _ref_hard_negative(img_z1, attr_z, params["tia"], params["tau_plus"],
                              params["beta"], params["etia"], attr_uni)
    r_ta = _ref_hard_negative(text_z, attr_z, params["tta"], params["tau_plus"],
                              params["beta"], params["etta"], attr_uni)
    r_ii = _ref_hard_negative(img_z1, img_z2, params["tii"], params["tau_plus"],
                              params["beta"], params["etii"])
    ref = (r_it + r_ia + r_ta) / 3.0 + r_ii
    assert jnp.allclose(loss, ref, rtol=1e-5, atol=1e-5), (float(loss), float(ref))

    print("KERNEL_OK")
</pallas_src>

<mosaic_0001>
module attributes {stable_mosaic.version = 11 : i64} {
  func.func @_hardneg_kernel(%arg0: i32, %arg1: i32, %arg2: memref<16x32xf32, #tpu.memory_space<vmem>>, %arg3: memref<16x32xf32, #tpu.memory_space<vmem>>, %arg4: memref<16x1xf32, #tpu.memory_space<vmem>>, %arg5: memref<16x1xf32, #tpu.memory_space<vmem>>, %arg6: memref<16x1xf32, #tpu.memory_space<vmem>>, %arg7: memref<16x1xf32, #tpu.memory_space<vmem>>) attributes {dimension_semantics = [#tpu.dimension_semantics<parallel>, #tpu.dimension_semantics<arbitrary>], iteration_bounds = array<i64: 1, 1>, scalar_prefetch = 0 : i64, scratch_operands = 2 : i64, tpu.core_type = #tpu.core_type<tc>, window_params = [{transform_indices = @transform_0, window_bounds = array<i64: 16, 32>}, {transform_indices = @transform_1, window_bounds = array<i64: 16, 32>}, {transform_indices = @transform_2, window_bounds = array<i64: 16, 1>}, {transform_indices = @transform_3, window_bounds = array<i64: 16, 1>}]} {
    %c0_i32 = arith.constant 0 : i32
    %0 = arith.cmpi eq, %arg1, %c0_i32 : i32
    %1 = arith.extui %0 : i1 to i32
    %c0_i32_0 = arith.constant 0 : i32
    %2 = arith.cmpi ne, %1, %c0_i32_0 : i32
    scf.if %2 {
      %cst_24 = arith.constant 0.000000e+00 : f32
      %49 = vector.broadcast %cst_24 : f32 to vector<16x1xf32>
      %c0_25 = arith.constant 0 : index
      %c0_26 = arith.constant 0 : index
      %50 = vector.load %arg6[%c0_25, %c0_26] : memref<16x1xf32, #tpu.memory_space<vmem>>, vector<16x1xf32>
      tpu.vector_store %arg6[%c0_25, %c0_26], %49 {strides = array<i32>} : memref<16x1xf32, #tpu.memory_space<vmem>>, vector<16x1xf32>,
      %cst_27 = arith.constant 0.000000e+00 : f32
      %51 = vector.broadcast %cst_27 : f32 to vector<16x1xf32>
      %c0_28 = arith.constant 0 : index
      %c0_29 = arith.constant 0 : index
      %52 = vector.load %arg7[%c0_28, %c0_29] : memref<16x1xf32, #tpu.memory_space<vmem>>, vector<16x1xf32>
      tpu.vector_store %arg7[%c0_28, %c0_29], %51 {strides = array<i32>} : memref<16x1xf32, #tpu.memory_space<vmem>>, vector<16x1xf32>,
    } else {
    }
    %c0 = arith.constant 0 : index
    %c0_1 = arith.constant 0 : index
    %3 = vector.load %arg2[%c0, %c0_1] : memref<16x32xf32, #tpu.memory_space<vmem>>, vector<16x32xf32>
    %c0_2 = arith.constant 0 : index
    %c0_3 = arith.constant 0 : index
    %4 = vector.load %arg3[%c0_2, %c0_3] : memref<16x32xf32, #tpu.memory_space<vmem>>, vector<16x32xf32>
    %cst = arith.constant dense<0.000000e+00> : vector<16x16xf32>
    %5 = tpu.matmul %3, %4, %cst {dimension_numbers = #tpu.dot_dimension_numbers<[1], [1], [0], [0], [0, 0, 1, 0], [], []>} : vector<16x32xf32>, vector<16x32xf32>, vector<16x16xf32> -> vector<16x16xf32>
    %cst_4 = arith.constant 2.000000e+00 : f32
    %6 = vector.broadcast %cst_4 : f32 to vector<16x16xf32>
    %7 = arith.mulf %5, %6 : vector<16x16xf32>
    %c16_i32 = arith.constant 16 : i32
    %8 = arith.muli %arg0, %c16_i32 : i32
    %9 = tpu.iota {dimensions = array<i32: 0>} : vector<16x16xi32>
    %10 = vector.broadcast %8 : i32 to vector<16x16xi32>
    %11 = arith.addi %10, %9 : vector<16x16xi32>
    %c16_i32_5 = arith.constant 16 : i32
    %12 = arith.muli %arg1, %c16_i32_5 : i32
    %13 = tpu.iota {dimensions = array<i32: 1>} : vector<16x16xi32>
    %14 = vector.broadcast %12 : i32 to vector<16x16xi32>
    %15 = arith.addi %14, %13 : vector<16x16xi32>
    %c8_i32 = arith.constant 8 : i32
    %16 = vector.broadcast %c8_i32 : i32 to vector<16x16xi32>
    %17 = arith.cmpi slt, %11, %16 : vector<16x16xi32>
    %c8_i32_6 = arith.constant 8 : i32
    %18 = vector.broadcast %c8_i32_6 : i32 to vector<16x16xi32>
    %19 = arith.addi %11, %18 : vector<16x16xi32>
    %c8_i32_7 = arith.constant 8 : i32
    %20 = vector.broadcast %c8_i32_7 : i32 to vector<16x16xi32>
    %21 = arith.subi %11, %20 : vector<16x16xi32>
    %22 = arith.select %17, %19, %21 : vector<16x16xi1>, vector<16x16xi32>
    %23 = arith.cmpi ne, %15, %11 : vector<16x16xi32>
    %24 = arith.cmpi ne, %15, %22 : vector<16x16xi32>
    %25 = arith.andi %23, %24 : vector<16x16xi1>
    %c0_8 = arith.constant 0 : index
    %c0_9 = arith.constant 0 : index
    %26 = vector.load %arg6[%c0_8, %c0_9] : memref<16x1xf32, #tpu.memory_space<vmem>>, vector<16x1xf32>
    %cst_10 = arith.constant 1.000000e+00 : f32
    %27 = vector.broadcast %cst_10 : f32 to vector<16x16xf32>
    %28 = arith.mulf %27, %7 : vector<16x16xf32>
    %29 = math.exp %28 : vector<16x16xf32>
    %cst_11 = arith.constant 0.000000e+00 : f32
    %30 = vector.broadcast %cst_11 : f32 to vector<16x16xf32>
    %31 = arith.select %25, %29, %30 : vector<16x16xi1>, vector<16x16xf32>
    %cst_12 = arith.constant dense<0.000000e+00> : vector<16xf32>
    %32 = vector.multi_reduction <add>, %31, %cst_12 [1] : vector<16x16xf32> to vector<16xf32>
    %33 = vector.shape_cast %32 : vector<16xf32> to vector<16x1xf32>
    %34 = arith.addf %26, %33 : vector<16x1xf32>
    %c0_13 = arith.constant 0 : index
    %c0_14 = arith.constant 0 : index
    %35 = vector.load %arg6[%c0_13, %c0_14] : memref<16x1xf32, #tpu.memory_space<vmem>>, vector<16x1xf32>
    tpu.vector_store %arg6[%c0_13, %c0_14], %34 {strides = array<i32>} : memref<16x1xf32, #tpu.memory_space<vmem>>, vector<16x1xf32>,
    %c0_15 = arith.constant 0 : index
    %c0_16 = arith.constant 0 : index
    %36 = vector.load %arg7[%c0_15, %c0_16] : memref<16x1xf32, #tpu.memory_space<vmem>>, vector<16x1xf32>
    %cst_17 = arith.constant 2.000000e+00 : f32
    %37 = vector.broadcast %cst_17 : f32 to vector<16x16xf32>
    %38 = arith.mulf %37, %7 : vector<16x16xf32>
    %39 = math.exp %38 : vector<16x16xf32>
    %cst_18 = arith.constant 0.000000e+00 : f32
    %40 = vector.broadcast %cst_18 : f32 to vector<16x16xf32>
    %41 = arith.select %25, %39, %40 : vector<16x16xi1>, vector<16x16xf32>
    %cst_19 = arith.constant dense<0.000000e+00> : vector<16xf32>
    %42 = vector.multi_reduction <add>, %41, %cst_19 [1] : vector<16x16xf32> to vector<16xf32>
    %43 = vector.shape_cast %42 : vector<16xf32> to vector<16x1xf32>
    %44 = arith.addf %36, %43 : vector<16x1xf32>
    %c0_20 = arith.constant 0 : index
    %c0_21 = arith.constant 0 : index
    %45 = vector.load %arg7[%c0_20, %c0_21] : memref<16x1xf32, #tpu.memory_space<vmem>>, vector<16x1xf32>
    tpu.vector_store %arg7[%c0_20, %c0_21], %44 {strides = array<i32>} : memref<16x1xf32, #tpu.memory_space<vmem>>, vector<16x1xf32>,
    %c0_i32_22 = arith.constant 0 : i32
    %46 = arith.cmpi eq, %arg1, %c0_i32_22 : i32
    %47 = arith.extui %46 : i1 to i32
    %c0_i32_23 = arith.constant 0 : i32
    %48 = arith.cmpi ne, %47, %c0_i32_23 : i32
    scf.if %48 {
      %c0_24 = arith.constant 0 : index
      %c0_25 = arith.constant 0 : index
      %49 = vector.load %arg4[%c0_24, %c0_25] : memref<16x1xf32, #tpu.memory_space<vmem>>, vector<16x1xf32>
      %50 = math.exp %49 : vector<16x1xf32>
      %c0_26 = arith.constant 0 : index
      %c0_27 = arith.constant 0 : index
      %51 = vector.load %arg7[%c0_26, %c0_27] : memref<16x1xf32, #tpu.memory_space<vmem>>, vector<16x1xf32>
      %cst_28 = arith.constant 1.400000e+01 : f32
      %52 = vector.broadcast %cst_28 : f32 to vector<16x1xf32>
      %53 = arith.mulf %52, %51 : vector<16x1xf32>
      %c0_29 = arith.constant 0 : index
      %c0_30 = arith.constant 0 : index
      %54 = vector.load %arg6[%c0_29, %c0_30] : memref<16x1xf32, #tpu.memory_space<vmem>>, vector<16x1xf32>
      %55 = arith.divf %53, %54 : vector<16x1xf32>
      %cst_31 = arith.constant -1.400000e+00 : f32
      %56 = vector.broadcast %cst_31 : f32 to vector<16x1xf32>
      %57 = arith.mulf %56, %50 : vector<16x1xf32>
      %58 = arith.addf %57, %55 : vector<16x1xf32>
      %cst_32 = arith.constant 0.899999976 : f32
      %59 = vector.broadcast %cst_32 : f32 to vector<16x1xf32>
      %60 = arith.divf %58, %59 : vector<16x1xf32>
      %cst_33 = arith.constant 1.89469397 : f32
      %61 = vector.broadcast %cst_33 : f32 to vector<16x1xf32>
      %62 = arith.maximumf %60, %61 : vector<16x1xf32>
      %63 = arith.addf %50, %62 : vector<16x1xf32>
      %64 = arith.divf %50, %63 : vector<16x1xf32>
      %65 = math.log %64 : vector<16x1xf32>
      %cst_34 = arith.constant 0.000000e+00 : f32
      %66 = vector.broadcast %cst_34 : f32 to vector<16x1xf32>
      %67 = arith.subf %66, %65 : vector<16x1xf32>
      %c0_35 = arith.constant 0 : index
      %c0_36 = arith.constant 0 : index
      %68 = vector.load %arg5[%c0_35, %c0_36] : memref<16x1xf32, #tpu.memory_space<vmem>>, vector<16x1xf32>
      tpu.vector_store %arg5[%c0_35, %c0_36], %67 {strides = array<i32>} : memref<16x1xf32, #tpu.memory_space<vmem>>, vector<16x1xf32>,
    } else {
    }
    return
  }
  func.func @transform_0(%arg0: i32, %arg1: i32) -> (i32, i32) {
    %c0_i32 = arith.constant 0 : i32
    %c0_i32_0 = arith.constant 0 : i32
    return %arg0, %c0_i32 : i32, i32
  }
  func.func @transform_1(%arg0: i32, %arg1: i32) -> (i32, i32) {
    %c0_i32 = arith.constant 0 : i32
    %c0_i32_0 = arith.constant 0 : i32
    return %arg1, %c0_i32 : i32, i32
  }
  func.func @transform_2(%arg0: i32, %arg1: i32) -> (i32, i32) {
    %c0_i32 = arith.constant 0 : i32
    %c0_i32_0 = arith.constant 0 : i32
    return %arg0, %c0_i32 : i32, i32
  }
  func.func @transform_3(%arg0: i32, %arg1: i32) -> (i32, i32) {
    %c0_i32 = arith.constant 0 : i32
    %c0_i32_0 = arith.constant 0 : i32
    return %arg0, %c0_i32 : i32, i32
  }
}

</mosaic_0001>

<llo_original>
// kernel: tpu_custom_call.1
$region0: #{tpu_custom_call.1}
  #allocation0 [shape = 'u32[]', space=smem, size = 0x4, offset = 0x4, fixed_abs, tag = 'smem constant byte address 0x4 - core index']
  #allocation1 [shape = 'u32[144,128]{1,0:T(1,128)}', space=vmem, size = 0x12000, scoped, tag = 'internal scratch']
  #allocation2 [shape = 'f32[16,1]{1,0:T(8,128)}', space=vmem, size = 0x2000, scoped, tag = 'scratch operand']
  #allocation3 [shape = 'f32[16,1]{1,0:T(8,128)}', space=vmem, size = 0x2000, scoped, tag = 'scratch operand']
  %s0 = inlined_call_operand.vmem [shape: f32[16,32], index: 0, kind: input, shape index: {}]
  %s1 = inlined_call_operand.hbm [shape: f32[16,32], index: 1, kind: input, shape index: {}]
  %s2 = inlined_call_operand.vmem [shape: f32[16,1], index: 2, kind: input, shape index: {}]
  %s3 = inlined_call_operand.vmem [shape: f32[16,1], index: 3, kind: output, shape index: {}]
  %s4 = sld [smem:[#allocation0]]
  $region34: #{tpu_custom_call.1} parent=0
    _
  %s6 = ssub.s32 1, %s4
  %s7 = scalar_select 0, %s6, %s4
  $region1: #{tpu_custom_call.1} parent=0
    #allocation4 [shape = 'u8[8192]{0}', space=vmem, size = 0x2000, scoped, tag = 'input window, operand 1, single buffered']
    #allocation5 [shape = 's32[1]{0}', space=sflag, size = 0x4, scoped, tag = 'scoped memory for tpu_custom_call.1']
    %8 = vsyncpa [#allocation5], 0
    // Predicated region
    $region2: #{tpu_custom_call.1} parent=1 // pred_check
      _
    $region3: #{tpu_custom_call.1} parent=1 // pred_check_branch
      %10 = sbr.rel (0) target = $region5
    $region4: #{tpu_custom_call.1} parent=1 // pred_region
      _
    $region5: #{tpu_custom_call.1} parent=1 // pred_fallthru
      _
    // Predicated region
    $region6: #{tpu_custom_call.1} parent=1 // pred_check
      _
    $region7: #{tpu_custom_call.1} parent=1 // pred_check_branch
      %12 = sbr.rel (0) target = $region9
    $region8: #{tpu_custom_call.1} parent=1 // pred_region
      %s14 = ssub.s32 256, 256
      %15 = vsyncadd [#allocation5], %s14
      %s16 = sshll.u32 [#allocation4], 4
      %s17 = int_to_ptr.vmem [resolvable:$true] %s16
      %22 = dma.hbm_to_vmem [thread:$0]  %s1, 256, %s17, [#allocation5], 128, 128, 8
    $region9: #{tpu_custom_call.1} parent=1 // pred_fallthru
      _
    // Predicated region
    $region10: #{tpu_custom_call.1} parent=1 // pred_check
      _
    $region11: #{tpu_custom_call.1} parent=1 // pred_check_branch
      %24 = sbr.rel (0) target = $region13
    $region12: #{tpu_custom_call.1} parent=1 // pred_region
      _
    $region13: #{tpu_custom_call.1} parent=1 // pred_fallthru
      _
    // Predicated region
    $region14: #{tpu_custom_call.1} parent=1 // pred_check
      _
    $region15: #{tpu_custom_call.1} parent=1 // pred_check_branch
      %26 = sbr.rel (0) target = $region17
    $region16: #{tpu_custom_call.1} parent=1 // pred_region
      %27 = dma.done [#allocation5], 256
    $region17: #{tpu_custom_call.1} parent=1 // pred_fallthru
      _
    %p28 = scmp.eq.s32.totalorder 0, 0
    // Predicated region
    $region18: #{tpu_custom_call.1} parent=1 // pred_check
      %p29 = pneg %p28
    $region19: #{tpu_custom_call.1} parent=1 // pred_check_branch
      %31 = sbr.rel (%p29) target = $region21
    $region20: #{tpu_custom_call.1} parent=1 // pred_region
      %vm32 = vcmask 7168
      %33 = vst.msk [vmem:[#allocation2] sm:$0xff] %vm32, 0.0
      %34 = vst.msk [vmem:[#allocation2 + $0x8] sm:$0xff] %vm32, 0.0
      %35 = vst.msk [vmem:[#allocation3] sm:$0xff] %vm32, 0.0
      %36 = vst.msk [vmem:[#allocation3 + $0x8] sm:$0xff] %vm32, 0.0
    $region21: #{tpu_custom_call.1} parent=1 // pred_fallthru
      _
    %v37 = vld [vmem:[%s0] sm:$0xff]
    %v38 = vld [vmem:[%s0 + $0x8] sm:$0xff]
    %v39 = vld [vmem:[#allocation4] sm:$0xff]
    %v40 = vld [vmem:[#allocation4 + $0x8] sm:$0xff]
    %vm41 = vcmask 261120
    %v43 = vsel %vm41, %v37, 0
    %v46 = vsel %vm41, %v38, 0
    %v49 = vsel %vm41, %v39, 0
    %v52 = vsel %vm41, %v40, 0
    %54 = vmatprep.subr.mxu0 0.0
    %55 = vmatpush1.xpose.msra.mxu0 %v49
    %56 = vmatprep.subr.mxu0 0.0
    %57 = vmatpush1.xpose.msra.mxu0 %v52
    %58 = vmatprep.subr.mxu0 0.0
    %59 = vmatpush1.xpose.msra.mxu0 0.0
    %60 = vmatprep.subr.mxu0 0.0
    %61 = vmatpush1.xpose.msra.mxu0 0.0
    %62 = vmatprep.subr.mxu0 0.0
    %63 = vmatpush1.xpose.msra.mxu0 0.0
    %64 = vmatprep.subr.mxu0 0.0
    %65 = vmatpush1.xpose.msra.mxu0 0.0
    %66 = vmatprep.subr.mxu0 0.0
    %67 = vmatpush1.xpose.msra.mxu0 0.0
    %68 = vmatprep.subr.mxu0 0.0
    %69 = vmatpush1.xpose.msra.mxu0 0.0
    %70 = vmatprep.subr.mxu0 0.0
    %71 = vmatpush1.xpose.msra.mxu0 0.0
    %72 = vmatprep.subr.mxu0 0.0
    %73 = vmatpush1.xpose.msra.mxu0 0.0
    %74 = vmatprep.subr.mxu0 0.0
    %75 = vmatpush1.xpose.msra.mxu0 0.0
    %76 = vmatprep.subr.mxu0 0.0
    %77 = vmatpush1.xpose.msra.mxu0 0.0
    %78 = vmatprep.subr.mxu0 0.0
    %79 = vmatpush1.xpose.msra.mxu0 0.0
    %80 = vmatprep.subr.mxu0 0.0
    %81 = vmatpush1.xpose.msra.mxu0 0.0
    %82 = vmatprep.subr.mxu0 0.0
    %83 = vmatpush1.xpose.msra.mxu0 0.0
    %84 = vmatprep.subr.mxu0 0.0
    %85 = vmatpush1.xpose.msra.mxu0 0.0
    %86 = vmatprep.subr.mxu0 0.0
    %87 = vmatpush1.xpose.msra.mxu0 0.0
    %88 = vmatprep.subr.mxu0 0.0
    %89 = vmatpush1.xpose.msra.mxu0 0.0
    %90 = vmatprep.subr.mxu0 0.0
    %91 = vmatpush1.xpose.msra.mxu0 0.0
    %92 = vmatprep.subr.mxu0 0.0
    %93 = vmatpush1.xpose.msra.mxu0 0.0
    %94 = vmatprep.subr.mxu0 0.0
    %95 = vmatpush1.xpose.msra.mxu0 0.0
    %96 = vmatprep.subr.mxu0 0.0
    %97 = vmatpush1.xpose.msra.mxu0 0.0
    %98 = vmatprep.subr.mxu0 0.0
    %99 = vmatpush1.xpose.msra.mxu0 0.0
    %100 = vmatprep.subr.mxu0 0.0
    %101 = vmatpush1.xpose.msra.mxu0 0.0
    %102 = vmatprep.subr.mxu0 0.0
    %103 = vmatpush1.xpose.msra.mxu0 0.0
    %104 = vmatprep.subr.mxu0 0.0
    %105 = vmatpush1.xpose.msra.mxu0 0.0
    %106 = vmatprep.subr.mxu0 0.0
    %107 = vmatpush1.xpose.msra.mxu0 0.0
    %108 = vmatprep.subr.mxu0 0.0
    %109 = vmatpush1.xpose.msra.mxu0 0.0
    %110 = vmatprep.subr.mxu0 0.0
    %111 = vmatpush1.xpose.msra.mxu0 0.0
    %112 = vmatprep.subr.mxu0 0.0
    %113 = vmatpush1.xpose.msra.mxu0 0.0
    %114 = vmatprep.subr.mxu0 0.0
    %115 = vmatpush1.xpose.msra.mxu0 0.0
    %116 = vmatprep.subr.mxu0 0.0
    %117 = vmatpush1.xpose.msra.mxu0 0.0
    %118 = vmatprep.mubr.f32.mxu0 0.0
    %119 = vmatmul.mubr.f32.gmra.mrb[0].mxu0 %v43
    %v120 = vpop.f32.mrb[0].mxu0
    %v121 = vadd.f32 0.0, %v120
    %v122 = vpop.f32.mrb[0].mxu0
    %123 = vmatprep.mubr.f32.mxu0 0.0
    %124 = vmatmul.mubr.f32.gmra.mrb[0].mxu0 %v46
    %v125 = vpop.f32.mrb[0].mxu0
    %v126 = vadd.f32 0.0, %v125
    %v127 = vpop.f32.mrb[0].mxu0
    %128 = vdwg.mxu0
    %v129 = vmul.f32 %v121, 2.0
    %v130 = vmul.f32 %v126, 2.0
    %s131 = smul.u32 0, 16
    %v132 = vlaneseq
    %v133 = vshrl.u32 %v132, 7
    %v134 = vadd.s32 %v133, 8
    %v135 = vstv %s131
    %v136 = vadd.s32 %v135, %v133
    %v137 = vadd.s32 %v135, %v134
    %s138 = smul.u32 0, 16
    %v139 = vlaneseq
    %v140 = vand.u32 %v139, 127
    %v141 = vstv %s138
    %v142 = vadd.s32 %v141, %v140
    %vm143 = vcmp.lt.s32.totalorder %v136, 8
    %vm144 = vcmp.lt.s32.totalorder %v137, 8
    %v145 = vadd.s32 %v136, 8
    %v146 = vadd.s32 %v137, 8
    %v147 = vsub.s32 %v136, 8
    %v148 = vsub.s32 %v137, 8
    %v149 = vsel %vm143, %v145, %v147
    %v150 = vsel %vm144, %v146, %v148
    %vm151 = vcmp.ne.s32.totalorder %v142, %v136
    %vm152 = vcmp.ne.s32.totalorder %v142, %v137
    %vm153 = vcmp.ne.s32.totalorder %v142, %v149
    %vm154 = vcmp.ne.s32.totalorder %v142, %v150
    %vm155 = vmand %vm151, %vm153
    %vm156 = vmand %vm152, %vm154
    %v157 = vld [vmem:[#allocation2] sm:$0xff]
    %v158 = vld [vmem:[#allocation2 + $0x8] sm:$0xff]
    %v159 = vmul.f32 %v129, 1.442695
    %v160 = vpow.pop %v159
    %v161 = vmul.f32 %v130, 1.442695
    %v162 = vpow.pop %v161
    %v163 = vsel %vm155, %v160, 0.0
    %v164 = vsel %vm156, %v162, 0.0
    %vm165 = vcmask 130048
    %v166 = vsel %vm165, %v163, 0.0
    %167 = vadd.xlane.f32.xlu0 %v166
    %v168 = vpop.xlane.xlu0 %167
    %v169 = vsel %vm165, %v164, 0.0
    %170 = vadd.xlane.f32.xlu0 %v169
    %v171 = vpop.xlane.xlu0 %170
    %v172 = vadd.f32 %v157, %v168
    %v173 = vadd.f32 %v158, %v171
    %vm174 = vcmask 7168
    %175 = vst.msk [vmem:[#allocation2] sm:$0xff] %vm174, %v172
    %176 = vst.msk [vmem:[#allocation2 + $0x8] sm:$0xff] %vm174, %v173
    %v177 = vld [vmem:[#allocation3] sm:$0xff]
    %v178 = vld [vmem:[#allocation3 + $0x8] sm:$0xff]
    %v179 = vmul.f32 %v129, 2.0
    %v180 = vmul.f32 %v130, 2.0
    %v181 = vmul.f32 %v179, 1.442695
    %v182 = vpow.pop %v181
    %v183 = vmul.f32 %v180, 1.442695
    %v184 = vpow.pop %v183
    %v185 = vsel %vm155, %v182, 0.0
    %v186 = vsel %vm156, %v184, 0.0
    %v187 = vsel %vm165, %v185, 0.0
    %188 = vadd.xlane.f32.xlu0 %v187
    %v189 = vpop.xlane.xlu0 %188
    %v190 = vsel %vm165, %v186, 0.0
    %191 = vadd.xlane.f32.xlu0 %v190
    %v192 = vpop.xlane.xlu0 %191
    %v193 = vadd.f32 %v177, %v189
    %v194 = vadd.f32 %v178, %v192
    %195 = vst.msk [vmem:[#allocation3] sm:$0xff] %vm174, %v193
    %196 = vst.msk [vmem:[#allocation3 + $0x8] sm:$0xff] %vm174, %v194
    // Predicated region
    $region22: #{tpu_custom_call.1} parent=1 // pred_check
      %p197 = pneg %p28
    $region23: #{tpu_custom_call.1} parent=1 // pred_check_branch
      %199 = sbr.rel (%p197) target = $region25
    $region24: #{tpu_custom_call.1} parent=1 // pred_region
      %v200 = vld [vmem:[%s2] sm:$0xff]
      %v201 = vld [vmem:[%s2 + $0x8] sm:$0xff]
      %v202 = vmul.f32 %v200, 1.442695
      %v203 = vpow.pop %v202
      %v204 = vmul.f32 %v201, 1.442695
      %v205 = vpow.pop %v204
      %v206 = vld [vmem:[#allocation3] sm:$0xff]
      %v207 = vld [vmem:[#allocation3 + $0x8] sm:$0xff]
      %v208 = vmul.f32 %v206, 14.0
      %v209 = vmul.f32 %v207, 14.0
      %v210 = vld [vmem:[#allocation2] sm:$0xff]
      %v211 = vld [vmem:[#allocation2 + $0x8] sm:$0xff]
      %v212 = vrcp.pop %v210
      %v213 = vmul.f32 %v208, %v212
      %v214 = vrcp.pop %v211
      %v215 = vmul.f32 %v209, %v214
      %v216 = vmul.f32 %v203, -1.4
      %v217 = vmul.f32 %v205, -1.4
      %v218 = vadd.f32 %v216, %v213
      %v219 = vadd.f32 %v217, %v215
      %v220 = vrcp.pop 0.9
      %v221 = vmul.f32 %v218, %v220
      %v222 = vmul.f32 %v219, %v220
      %v223 = vmax.f32 %v221, 1.894694
      %v224 = vmax.f32 %v222, 1.894694
      %v225 = vadd.f32 %v203, %v223
      %v226 = vadd.f32 %v205, %v224
      %v227 = vrcp.pop %v225
      %v228 = vmul.f32 %v203, %v227
      %v229 = vrcp.pop %v226
      %v230 = vmul.f32 %v205, %v229
      %v231 = vlog2.pop %v228
      %v232 = vmul.f32 %v231, 0.6931472
      %v233 = vlog2.pop %v230
      %v234 = vmul.f32 %v233, 0.6931472
      %v235 = vsub.f32 0.0, %v232
      %v236 = vsub.f32 0.0, %v234
      %237 = vst.msk [vmem:[%s3] sm:$0xff] %vm174, %v235
      %238 = vst.msk [vmem:[%s3 + $0x8] sm:$0xff] %vm174, %v236
    $region25: #{tpu_custom_call.1} parent=1 // pred_fallthru
      _
    // Predicated region
    $region26: #{tpu_custom_call.1} parent=1 // pred_check
      _
    $region27: #{tpu_custom_call.1} parent=1 // pred_check_branch
      %240 = sbr.rel (0) target = $region29
    $region28: #{tpu_custom_call.1} parent=1 // pred_region
      _
    $region29: #{tpu_custom_call.1} parent=1 // pred_fallthru
      _
    // Predicated region
    $region30: #{tpu_custom_call.1} parent=1 // pred_check
      _
    $region31: #{tpu_custom_call.1} parent=1 // pred_check_branch
      %242 = sbr.rel (0) target = $region33
    $region32: #{tpu_custom_call.1} parent=1 // pred_region
      _
    $region33: #{tpu_custom_call.1} parent=1 // pred_fallthru
      _
    %243 = vsyncpa [#allocation5], 1

</llo_original>
